<compile_context>
chip_gen: v7x
topology: tpu7x:2x2x1
jax: 0.10.0
libtpu: 0.0.40
codegen_flags: <defaults>
</compile_context>

<pallas_src>
import functools

import jax
import jax.numpy as jnp
from jax.experimental import pallas as pl
from jax.experimental.pallas import tpu as pltpu


def _lane_pad(h):
    """Round hidden size up to a multiple of the 128-lane vreg width."""
    return ((h + 127) // 128) * 128


def _textcnn_fused_kernel(x_ref, w_ref, b_ref, o_ref, *,
                          kernel_sizes, block_b, seq_len, h_pad):
    """One batch tile of the fused TextCNN forward.

    x_ref: (block_b*L, C)    bf16  rows are batch-major: row = b*L + t
    w_ref: (C, T*Hp)         bf16  packed per-tap conv weights (zero padded)
    b_ref: (1, NB*Hp)        f32   packed per-branch bias (zero padded)
    o_ref: (block_b, NB*Hp)  f32   pooled outputs, lane-padded per branch
    """
    L, hp = seq_len, h_pad

    # Single MXU matmul covering every tap of every branch (f32 accumulation).
    y = jnp.dot(x_ref[...], w_ref[...], preferred_element_type=jnp.float32)

    # TODO(synk): for very long L, stream this epilogue over time chunks with a
    # running (block_b, Hp) max instead of holding all (block_b*L, T*Hp) taps.
    rows = []
    for b in range(block_b):                         # static unroll over tile rows
        yb = y[b * L:(b + 1) * L, :]                 # (L, T*Hp), one batch element
        pooled = []
        tap = 0
        for K in kernel_sizes:
            lout = L - K + 1
            # Conv1d as shift-and-add of the per-tap matmul outputs.
            acc = yb[0:lout, tap * hp:(tap + 1) * hp]
            for j in range(1, K):
                acc = acc + yb[j:j + lout, (tap + j) * hp:(tap + j + 1) * hp]
            pooled.append(jnp.max(acc, axis=0, keepdims=True))    # (1, Hp)
            tap += K
        rows.append(jnp.concatenate(pooled, axis=1))              # (1, NB*Hp)
    out = jnp.concatenate(rows, axis=0)                           # (block_b, NB*Hp)

    # Bias + ReLU after the max-pool (exact because bias is time-invariant and
    # relu is monotone: max_t relu(y_t + b) == relu(max_t y_t + b)).
    o_ref[...] = jnp.maximum(out + b_ref[...], 0.0)


def pack_params(params_pt, input_size, hidden_size, kernel_sizes,
                compute_dtype=jnp.bfloat16):
    """Pack PyTorch-layout Conv1d params once into MXU/lane-friendly slabs.

    params_pt: list of (w, b) with w in PyTorch layout (H, C_in, K), b (H,).
    Returns:
      w_all: (C_in, T*Hp)  compute_dtype, T = sum(kernel_sizes), zero padded
      b_all: (1, NB*Hp)    f32, zero padded
    """
    hp = _lane_pad(hidden_size)
    n_taps = sum(kernel_sizes)
    nb = len(kernel_sizes)
    w_all = jnp.zeros((input_size, n_taps * hp), jnp.float32)
    b_all = jnp.zeros((1, nb * hp), jnp.float32)
    tap = 0
    for i, ((w_pt, b), K) in enumerate(zip(params_pt, kernel_sizes)):
        for j in range(K):
            col = (tap + j) * hp
            # (H, C) tap -> (C, H)
            w_all = w_all.at[:, col:col + hidden_size].set(w_pt[:, :, j].T)
        b_all = b_all.at[:, i * hp:i * hp + hidden_size].set(b[None, :])
        tap += K
    return w_all.astype(compute_dtype), b_all


def textcnn_forward(x, packed_w, packed_b, kernel_sizes, hidden_size,
                    block_b=None, compute_dtype=jnp.bfloat16):
    """Fused TextCNN forward. x: (B, L, C_in) -> (B, H*len(kernel_sizes))."""
    B, L, C = x.shape
    hp = _lane_pad(hidden_size)
    nb = len(kernel_sizes)
    n_taps = sum(kernel_sizes)
    assert packed_w.shape == (C, n_taps * hp)

    if block_b is None:
        # Small batches: one tile.  Larger batches: multiple-of-8 tiles so the
        # (block_b, NB*Hp) output block satisfies the (8, 128) constraint.
        block_b = B if B <= 8 else 8
    n_tiles = pl.cdiv(B, block_b)

    # Metadata-only reshape (row-major) + bf16 cast done once in the wrapper.
    x2d = x.astype(compute_dtype).reshape(B * L, C)

    kernel = functools.partial(
        _textcnn_fused_kernel,
        kernel_sizes=tuple(kernel_sizes), block_b=block_b, seq_len=L, h_pad=hp)

    out_padded = pl.pallas_call(
        kernel,
        out_shape=jax.ShapeDtypeStruct((B, nb * hp), jnp.float32),
        grid=(n_tiles,),
        in_specs=[
            pl.BlockSpec((block_b * L, C), lambda i: (i, 0)),
            pl.BlockSpec((C, n_taps * hp), lambda i: (0, 0)),
            pl.BlockSpec((1, nb * hp), lambda i: (0, 0)),
        ],
        out_specs=pl.BlockSpec((block_b, nb * hp), lambda i: (i, 0)),
        compiler_params=pltpu.CompilerParams(
            dimension_semantics=("parallel",)),
    )(x2d, packed_w, packed_b)

    # Strip the per-branch lane padding -> (B, NB*H).
    out = out_padded.reshape(B, nb, hp)[:, :, :hidden_size].reshape(
        B, nb * hidden_size)
    # TODO(synk): nn.Dropout is identity at inference; training-mode random
    # masking is intentionally not implemented.
    return out


def init_params(key, input_size, hidden_size, kernel_sizes):
    """PyTorch Conv1d-style init: (H, C_in, K) weights, (H,) bias."""
    params = []
    for i, k in enumerate(kernel_sizes):
        kw, kb = jax.random.split(jax.random.fold_in(key, i))
        fan_in = input_size * k
        bound = 1.0 / jnp.sqrt(fan_in)
        w = jax.random.uniform(kw, (hidden_size, input_size, k),
                               jnp.float32, -bound, bound)
        b = jax.random.uniform(kb, (hidden_size,), jnp.float32, -bound, bound)
        params.append((w, b))
    return params


def reference_forward(x, params_pt, compute_dtype=jnp.bfloat16):
    """Pure-JAX reference with the same bf16-in / f32-accumulate math."""
    pooled = []
    xc = x.astype(compute_dtype)
    B, L, _ = x.shape
    for (w_pt, b) in params_pt:
        H, C, K = w_pt.shape
        lout = L - K + 1
        acc = jnp.zeros((B, lout, H), jnp.float32)
        for j in range(K):
            acc = acc + jnp.einsum(
                "blc,hc->blh", xc[:, j:j + lout, :],
                w_pt[:, :, j].astype(compute_dtype),
                preferred_element_type=jnp.float32)
        conv = jnp.maximum(acc + b[None, None, :], 0.0)
        pooled.append(jnp.max(conv, axis=1))
    return jnp.concatenate(pooled, axis=1)


if __name__ == "__main__":
    key = jax.random.PRNGKey(0)

    batch = 2
    seq_len = 12
    input_size = 16      # embedding / feature dim (last axis of x)
    hidden_size = 16
    kernel_sizes = (2, 3, 4)
    dropout = 0.5        # identity at inference

    kx, kp = jax.random.split(key)
    x = jax.random.normal(kx, (batch, seq_len, input_size), jnp.float32)
    params_pt = init_params(kp, input_size, hidden_size, kernel_sizes)

    # One-time parameter packing (transpose + lane padding + bf16 cast).
    packed_w, packed_b = pack_params(params_pt, input_size, hidden_size,
                                     kernel_sizes)

    out = textcnn_forward(x, packed_w, packed_b, kernel_sizes, hidden_size)
    out = jax.block_until_ready(out)

    ref = reference_forward(x, params_pt)
    assert out.shape == (batch, hidden_size * len(kernel_sizes)), out.shape
    assert jnp.allclose(out, ref, atol=1e-3, rtol=1e-3), float(
        jnp.max(jnp.abs(out - ref)))

    print("KERNEL_OK")
</pallas_src>

<mosaic_0001>
module attributes {stable_mosaic.version = 11 : i64} {
  func.func @_textcnn_fused_kernel(%arg0: i32, %arg1: memref<24x16xbf16, #tpu.memory_space<vmem>>, %arg2: memref<16x1152xbf16, #tpu.memory_space<vmem>>, %arg3: memref<1x384xf32, #tpu.memory_space<vmem>>, %arg4: memref<2x384xf32, #tpu.memory_space<vmem>>) attributes {dimension_semantics = [#tpu.dimension_semantics<parallel>], iteration_bounds = array<i64: 1>, scalar_prefetch = 0 : i64, scratch_operands = 0 : i64, tpu.core_type = #tpu.core_type<tc>, window_params = [{transform_indices = @transform_0, window_bounds = array<i64: 24, 16>}, {pipeline_mode = #tpu.pipeline_mode<synchronous>, transform_indices = @transform_1, window_bounds = array<i64: 16, 1152>}, {pipeline_mode = #tpu.pipeline_mode<synchronous>, transform_indices = @transform_2, window_bounds = array<i64: 1, 384>}, {transform_indices = @transform_3, window_bounds = array<i64: 2, 384>}]} {
    %c0 = arith.constant 0 : index
    %c0_0 = arith.constant 0 : index
    %0 = vector.load %arg1[%c0, %c0_0] : memref<24x16xbf16, #tpu.memory_space<vmem>>, vector<24x16xbf16>
    %c0_1 = arith.constant 0 : index
    %c0_2 = arith.constant 0 : index
    %1 = vector.load %arg2[%c0_1, %c0_2] : memref<16x1152xbf16, #tpu.memory_space<vmem>>, vector<16x1152xbf16>
    %cst = arith.constant dense<0.000000e+00> : vector<24x1152xf32>
    %2 = tpu.matmul %0, %1, %cst {dimension_numbers = #tpu.dot_dimension_numbers<[1], [0], [0], [1], [0, 0, 1, 1], [], []>} : vector<24x16xbf16>, vector<16x1152xbf16>, vector<24x1152xf32> -> vector<24x1152xf32>
    %3 = vector.extract_strided_slice %2 {offsets = [0, 0], sizes = [12, 1152], strides = [1, 1]} : vector<24x1152xf32> to vector<12x1152xf32>
    %4 = vector.extract_strided_slice %3 {offsets = [0, 0], sizes = [11, 128], strides = [1, 1]} : vector<12x1152xf32> to vector<11x128xf32>
    %5 = vector.extract_strided_slice %3 {offsets = [1, 128], sizes = [11, 128], strides = [1, 1]} : vector<12x1152xf32> to vector<11x128xf32>
    %6 = arith.addf %4, %5 : vector<11x128xf32>
    %cst_3 = arith.constant dense<0xFF800000> : vector<128xf32>
    %7 = vector.multi_reduction <maximumf>, %6, %cst_3 [0] : vector<11x128xf32> to vector<128xf32>
    %8 = vector.shape_cast %7 : vector<128xf32> to vector<1x128xf32>
    %9 = vector.extract_strided_slice %3 {offsets = [0, 256], sizes = [10, 128], strides = [1, 1]} : vector<12x1152xf32> to vector<10x128xf32>
    %10 = vector.extract_strided_slice %3 {offsets = [1, 384], sizes = [10, 128], strides = [1, 1]} : vector<12x1152xf32> to vector<10x128xf32>
    %11 = arith.addf %9, %10 : vector<10x128xf32>
    %12 = vector.extract_strided_slice %3 {offsets = [2, 512], sizes = [10, 128], strides = [1, 1]} : vector<12x1152xf32> to vector<10x128xf32>
    %13 = arith.addf %11, %12 : vector<10x128xf32>
    %cst_4 = arith.constant dense<0xFF800000> : vector<128xf32>
    %14 = vector.multi_reduction <maximumf>, %13, %cst_4 [0] : vector<10x128xf32> to vector<128xf32>
    %15 = vector.shape_cast %14 : vector<128xf32> to vector<1x128xf32>
    %16 = vector.extract_strided_slice %3 {offsets = [0, 640], sizes = [9, 128], strides = [1, 1]} : vector<12x1152xf32> to vector<9x128xf32>
    %17 = vector.extract_strided_slice %3 {offsets = [1, 768], sizes = [9, 128], strides = [1, 1]} : vector<12x1152xf32> to vector<9x128xf32>
    %18 = arith.addf %16, %17 : vector<9x128xf32>
    %19 = vector.extract_strided_slice %3 {offsets = [2, 896], sizes = [9, 128], strides = [1, 1]} : vector<12x1152xf32> to vector<9x128xf32>
    %20 = arith.addf %18, %19 : vector<9x128xf32>
    %21 = vector.extract_strided_slice %3 {offsets = [3, 1024], sizes = [9, 128], strides = [1, 1]} : vector<12x1152xf32> to vector<9x128xf32>
    %22 = arith.addf %20, %21 : vector<9x128xf32>
    %cst_5 = arith.constant dense<0xFF800000> : vector<128xf32>
    %23 = vector.multi_reduction <maximumf>, %22, %cst_5 [0] : vector<9x128xf32> to vector<128xf32>
    %24 = vector.shape_cast %23 : vector<128xf32> to vector<1x128xf32>
    %25 = tpu.concatenate %8, %15, %24 in 1 : vector<1x128xf32>, vector<1x128xf32>, vector<1x128xf32> -> vector<1x384xf32>
    %26 = vector.extract_strided_slice %2 {offsets = [12, 0], sizes = [12, 1152], strides = [1, 1]} : vector<24x1152xf32> to vector<12x1152xf32>
    %27 = vector.extract_strided_slice %26 {offsets = [0, 0], sizes = [11, 128], strides = [1, 1]} : vector<12x1152xf32> to vector<11x128xf32>
    %28 = vector.extract_strided_slice %26 {offsets = [1, 128], sizes = [11, 128], strides = [1, 1]} : vector<12x1152xf32> to vector<11x128xf32>
    %29 = arith.addf %27, %28 : vector<11x128xf32>
    %cst_6 = arith.constant dense<0xFF800000> : vector<128xf32>
    %30 = vector.multi_reduction <maximumf>, %29, %cst_6 [0] : vector<11x128xf32> to vector<128xf32>
    %31 = vector.shape_cast %30 : vector<128xf32> to vector<1x128xf32>
    %32 = vector.extract_strided_slice %26 {offsets = [0, 256], sizes = [10, 128], strides = [1, 1]} : vector<12x1152xf32> to vector<10x128xf32>
    %33 = vector.extract_strided_slice %26 {offsets = [1, 384], sizes = [10, 128], strides = [1, 1]} : vector<12x1152xf32> to vector<10x128xf32>
    %34 = arith.addf %32, %33 : vector<10x128xf32>
    %35 = vector.extract_strided_slice %26 {offsets = [2, 512], sizes = [10, 128], strides = [1, 1]} : vector<12x1152xf32> to vector<10x128xf32>
    %36 = arith.addf %34, %35 : vector<10x128xf32>
    %cst_7 = arith.constant dense<0xFF800000> : vector<128xf32>
    %37 = vector.multi_reduction <maximumf>, %36, %cst_7 [0] : vector<10x128xf32> to vector<128xf32>
    %38 = vector.shape_cast %37 : vector<128xf32> to vector<1x128xf32>
    %39 = vector.extract_strided_slice %26 {offsets = [0, 640], sizes = [9, 128], strides = [1, 1]} : vector<12x1152xf32> to vector<9x128xf32>
    %40 = vector.extract_strided_slice %26 {offsets = [1, 768], sizes = [9, 128], strides = [1, 1]} : vector<12x1152xf32> to vector<9x128xf32>
    %41 = arith.addf %39, %40 : vector<9x128xf32>
    %42 = vector.extract_strided_slice %26 {offsets = [2, 896], sizes = [9, 128], strides = [1, 1]} : vector<12x1152xf32> to vector<9x128xf32>
    %43 = arith.addf %41, %42 : vector<9x128xf32>
    %44 = vector.extract_strided_slice %26 {offsets = [3, 1024], sizes = [9, 128], strides = [1, 1]} : vector<12x1152xf32> to vector<9x128xf32>
    %45 = arith.addf %43, %44 : vector<9x128xf32>
    %cst_8 = arith.constant dense<0xFF800000> : vector<128xf32>
    %46 = vector.multi_reduction <maximumf>, %45, %cst_8 [0] : vector<9x128xf32> to vector<128xf32>
    %47 = vector.shape_cast %46 : vector<128xf32> to vector<1x128xf32>
    %48 = tpu.concatenate %31, %38, %47 in 1 : vector<1x128xf32>, vector<1x128xf32>, vector<1x128xf32> -> vector<1x384xf32>
    %49 = tpu.concatenate %25, %48 in 0 : vector<1x384xf32>, vector<1x384xf32> -> vector<2x384xf32>
    %c0_9 = arith.constant 0 : index
    %c0_10 = arith.constant 0 : index
    %50 = vector.load %arg3[%c0_9, %c0_10] : memref<1x384xf32, #tpu.memory_space<vmem>>, vector<1x384xf32>
    %51 = vector.broadcast %50 : vector<1x384xf32> to vector<2x384xf32>
    %52 = arith.addf %49, %51 : vector<2x384xf32>
    %cst_11 = arith.constant 0.000000e+00 : f32
    %53 = vector.broadcast %cst_11 : f32 to vector<2x384xf32>
    %54 = arith.maximumf %52, %53 : vector<2x384xf32>
    %c0_12 = arith.constant 0 : index
    %c0_13 = arith.constant 0 : index
    %55 = vector.load %arg4[%c0_12, %c0_13] : memref<2x384xf32, #tpu.memory_space<vmem>>, vector<2x384xf32>
    tpu.vector_store %arg4[%c0_12, %c0_13], %54 {strides = array<i32>} : memref<2x384xf32, #tpu.memory_space<vmem>>, vector<2x384xf32>,
    return
  }
  func.func @transform_0(%arg0: i32) -> (i32, i32) {
    %c0_i32 = arith.constant 0 : i32
    %c0_i32_0 = arith.constant 0 : i32
    return %arg0, %c0_i32 : i32, i32
  }
  func.func @transform_1(%arg0: i32) -> (i32, i32) {
    %c0_i32 = arith.constant 0 : i32
    %c0_i32_0 = arith.constant 0 : i32
    %c0_i32_1 = arith.constant 0 : i32
    return %c0_i32, %c0_i32_0 : i32, i32
  }
  func.func @transform_2(%arg0: i32) -> (i32, i32) {
    %c0_i32 = arith.constant 0 : i32
    %c0_i32_0 = arith.constant 0 : i32
    %c0_i32_1 = arith.constant 0 : i32
    return %c0_i32, %c0_i32_0 : i32, i32
  }
  func.func @transform_3(%arg0: i32) -> (i32, i32) {
    %c0_i32 = arith.constant 0 : i32
    %c0_i32_0 = arith.constant 0 : i32
    return %arg0, %c0_i32 : i32, i32
  }
}

</mosaic_0001>

<llo_original>
// kernel: tpu_custom_call.1
$region0: #{tpu_custom_call.1}
  #allocation0 [shape = 'u32[]', space=smem, size = 0x4, offset = 0x4, fixed_abs, tag = 'smem constant byte address 0x4 - core index']
  #allocation1 [shape = 'u32[144,128]{1,0:T(1,128)}', space=vmem, size = 0x12000, scoped, tag = 'internal scratch']
  %s0 = inlined_call_operand.vmem [shape: bf16[24,16], index: 0, kind: input, shape index: {}]
  %s1 = inlined_call_operand.hbm [shape: bf16[16,1152], index: 1, kind: input, shape index: {}]
  %s2 = inlined_call_operand.vmem [shape: f32[1,384], index: 2, kind: input, shape index: {}]
  %s3 = inlined_call_operand.hbm [shape: f32[2,384], index: 3, kind: output, shape index: {}]
  %s4 = sld [smem:[#allocation0]]
  $region26: #{tpu_custom_call.1} parent=0
    _
  %s6 = ssub.s32 1, %s4
  %s7 = scalar_select 0, %s6, %s4
  $region1: #{tpu_custom_call.1} parent=0
    #allocation2 [shape = 'u8[36864]{0}', space=vmem, size = 0x9000, scoped, tag = 'input window, operand 1, single buffered']
    #allocation3 [shape = 's32[1]{0}', space=sflag, size = 0x4, scoped, tag = 'scoped memory for tpu_custom_call.1']
    #allocation4 [shape = 's32[1]{0}', space=sflag, size = 0x4, scoped, tag = 'scoped memory for tpu_custom_call.1']
    #allocation5 [shape = 'u8[3072]{0}', space=vmem, size = 0xc00, scoped, tag = 'output window, operand 0, single buffered']
    %8 = vsyncpa [#allocation3], 0
    %9 = vsyncpa [#allocation4], 0
    // Predicated region
    $region2: #{tpu_custom_call.1} parent=1 // pred_check
      _
    $region3: #{tpu_custom_call.1} parent=1 // pred_check_branch
      %11 = sbr.rel (0) target = $region5
    $region4: #{tpu_custom_call.1} parent=1 // pred_region
      _
    $region5: #{tpu_custom_call.1} parent=1 // pred_fallthru
      _
    // Predicated region
    $region6: #{tpu_custom_call.1} parent=1 // pred_check
      _
    $region7: #{tpu_custom_call.1} parent=1 // pred_check_branch
      %13 = sbr.rel (0) target = $region9
    $region8: #{tpu_custom_call.1} parent=1 // pred_region
      %s15 = ssub.s32 1152, 1152
      %16 = vsyncadd [#allocation3], %s15
      %s17 = sshll.u32 [#allocation2], 4
      %s18 = int_to_ptr.vmem [resolvable:$true] %s17
      %23 = dma.hbm_to_vmem [thread:$0]  %s1, 1152, %s18, [#allocation3], 576, 576, 36
    $region9: #{tpu_custom_call.1} parent=1 // pred_fallthru
      _
    // Predicated region
    $region10: #{tpu_custom_call.1} parent=1 // pred_check
      _
    $region11: #{tpu_custom_call.1} parent=1 // pred_check_branch
      %25 = sbr.rel (0) target = $region13
    $region12: #{tpu_custom_call.1} parent=1 // pred_region
      _
    $region13: #{tpu_custom_call.1} parent=1 // pred_fallthru
      _
    // Predicated region
    $region14: #{tpu_custom_call.1} parent=1 // pred_check
      _
    $region15: #{tpu_custom_call.1} parent=1 // pred_check_branch
      %27 = sbr.rel (0) target = $region17
    $region16: #{tpu_custom_call.1} parent=1 // pred_region
      %28 = dma.done [#allocation3], 1152
    $region17: #{tpu_custom_call.1} parent=1 // pred_fallthru
      _
    %v30 = vld [vmem:[%s0] sm:$0xf]
    %v31 = vld [vmem:[%s0 + $0x4] sm:$0xf]
    %v32 = vld [vmem:[%s0 + $0x8] sm:$0xf]
    %v33 = vld [vmem:[#allocation2] sm:$0xff]
    %v34 = vld [vmem:[#allocation2 + $0x8] sm:$0xff]
    %v35 = vld [vmem:[#allocation2 + $0x10] sm:$0xff]
    %v36 = vld [vmem:[#allocation2 + $0x18] sm:$0xff]
    %v37 = vld [vmem:[#allocation2 + $0x20] sm:$0xf]
    %v38 = vld [vmem:[#allocation2 + $0x24] sm:$0xff]
    %v39 = vld [vmem:[#allocation2 + $0x2c] sm:$0xff]
    %v40 = vld [vmem:[#allocation2 + $0x34] sm:$0xff]
    %v41 = vld [vmem:[#allocation2 + $0x3c] sm:$0xff]
    %v42 = vld [vmem:[#allocation2 + $0x44] sm:$0xf]
    %v46 = vunpack.c.l.b16 %v30
    %v47 = vunpack.c.l.b16 %v31
    %v48 = vunpack.c.l.b16 %v32
    %v49 = vpack.c.b16 %v47, %v46
    %v50 = vpack.c.b16 %v48, %v48
    %v61 = vunpack.c.l.b16 %v33
    %v62 = vunpack.c.h.b16 %v33
    %v63 = vunpack.c.l.b16 %v34
    %v64 = vunpack.c.h.b16 %v34
    %v65 = vunpack.c.l.b16 %v35
    %v66 = vunpack.c.h.b16 %v35
    %v67 = vunpack.c.l.b16 %v36
    %v68 = vunpack.c.h.b16 %v36
    %v69 = vunpack.c.l.b16 %v37
    %v70 = vunpack.c.l.b16 %v38
    %v71 = vunpack.c.h.b16 %v38
    %v72 = vunpack.c.l.b16 %v39
    %v73 = vunpack.c.h.b16 %v39
    %v74 = vunpack.c.l.b16 %v40
    %v75 = vunpack.c.h.b16 %v40
    %v76 = vunpack.c.l.b16 %v41
    %v77 = vunpack.c.h.b16 %v41
    %v78 = vunpack.c.l.b16 %v42
    %v79 = vpack.c.b16 %v70, %v61
    %v80 = vpack.c.b16 %v71, %v62
    %v81 = vpack.c.b16 %v72, %v63
    %v82 = vpack.c.b16 %v73, %v64
    %v83 = vpack.c.b16 %v74, %v65
    %v84 = vpack.c.b16 %v75, %v66
    %v85 = vpack.c.b16 %v76, %v67
    %v86 = vpack.c.b16 %v77, %v68
    %v87 = vpack.c.b16 %v78, %v69
    %vm97 = vcmask 130048
    %v99 = vsel %vm97, %v49, 0
    %v102 = vsel %vm97, %v50, 0
    %104 = vmatprep.subr.bf16.mxu0 %v80
    %105 = vmatpush1.bf16.msra.mxu0 %v79
    %106 = vmatprep.subr.bf16.mxu0 0
    %107 = vmatpush1.bf16.msra.mxu0 0
    %108 = vmatprep.subr.bf16.mxu0 0
    %109 = vmatpush1.bf16.msra.mxu0 0
    %110 = vmatprep.subr.bf16.mxu0 0
    %111 = vmatpush1.bf16.msra.mxu0 0
    %112 = vmatprep.subr.bf16.mxu0 0
    %113 = vmatpush1.bf16.msra.mxu0 0
    %114 = vmatprep.subr.bf16.mxu0 0
    %115 = vmatpush1.bf16.msra.mxu0 0
    %116 = vmatprep.subr.bf16.mxu0 0
    %117 = vmatpush1.bf16.msra.mxu0 0
    %118 = vmatprep.subr.bf16.mxu0 0
    %119 = vmatpush1.bf16.msra.mxu0 0
    %120 = vmatprep.subr.bf16.mxu0 0
    %121 = vmatpush1.bf16.msra.mxu0 0
    %122 = vmatprep.subr.bf16.mxu0 0
    %123 = vmatpush1.bf16.msra.mxu0 0
    %124 = vmatprep.subr.bf16.mxu0 0
    %125 = vmatpush1.bf16.msra.mxu0 0
    %126 = vmatprep.subr.bf16.mxu0 0
    %127 = vmatpush1.bf16.msra.mxu0 0
    %128 = vmatprep.subr.bf16.mxu0 0
    %129 = vmatpush1.bf16.msra.mxu0 0
    %130 = vmatprep.subr.bf16.mxu0 0
    %131 = vmatpush1.bf16.msra.mxu0 0
    %132 = vmatprep.subr.bf16.mxu0 0
    %133 = vmatpush1.bf16.msra.mxu0 0
    %134 = vmatprep.subr.bf16.mxu0 0
    %135 = vmatpush1.bf16.msra.mxu0 0
    %136 = vmatprep.mubr.bf16.mxu0 0
    %137 = vmatmul.mubr.bf16.gmra.mrb[0].mxu0 %v99
    %v138 = vpop.f32.mrb[0].mxu0
    %v139 = vadd.f32 0.0, %v138
    %v140 = vpop.f32.mrb[0].mxu0
    %v141 = vadd.f32 0.0, %v140
    %v142 = vpop.f32.mrb[0].mxu0
    %v143 = vadd.f32 0.0, %v142
    %v144 = vpop.f32.mrb[0].mxu0
    %v145 = vadd.f32 0.0, %v144
    %146 = vmatprep.mubr.bf16.mxu0 0
    %147 = vmatmul.mubr.bf16.gmra.mrb[0].mxu0 %v102
    %v148 = vpop.f32.mrb[0].mxu0
    %v149 = vadd.f32 0.0, %v148
    %v150 = vpop.f32.mrb[0].mxu0
    %v151 = vadd.f32 0.0, %v150
    %v152 = vpop.f32.mrb[0].mxu0
    %v153 = vpop.f32.mrb[0].mxu0
    %154 = vdwg.mxu0
    %155 = vmatprep.subr.bf16.mxu0 %v82
    %156 = vmatpush1.bf16.msra.mxu0 %v81
    %157 = vmatprep.subr.bf16.mxu0 0
    %158 = vmatpush1.bf16.msra.mxu0 0
    %159 = vmatprep.subr.bf16.mxu0 0
    %160 = vmatpush1.bf16.msra.mxu0 0
    %161 = vmatprep.subr.bf16.mxu0 0
    %162 = vmatpush1.bf16.msra.mxu0 0
    %163 = vmatprep.subr.bf16.mxu0 0
    %164 = vmatpush1.bf16.msra.mxu0 0
    %165 = vmatprep.subr.bf16.mxu0 0
    %166 = vmatpush1.bf16.msra.mxu0 0
    %167 = vmatprep.subr.bf16.mxu0 0
    %168 = vmatpush1.bf16.msra.mxu0 0
    %169 = vmatprep.subr.bf16.mxu0 0
    %170 = vmatpush1.bf16.msra.mxu0 0
    %171 = vmatprep.subr.bf16.mxu0 0
    %172 = vmatpush1.bf16.msra.mxu0 0
    %173 = vmatprep.subr.bf16.mxu0 0
    %174 = vmatpush1.bf16.msra.mxu0 0
    %175 = vmatprep.subr.bf16.mxu0 0
    %176 = vmatpush1.bf16.msra.mxu0 0
    %177 = vmatprep.subr.bf16.mxu0 0
    %178 = vmatpush1.bf16.msra.mxu0 0
    %179 = vmatprep.subr.bf16.mxu0 0
    %180 = vmatpush1.bf16.msra.mxu0 0
    %181 = vmatprep.subr.bf16.mxu0 0
    %182 = vmatpush1.bf16.msra.mxu0 0
    %183 = vmatprep.subr.bf16.mxu0 0
    %184 = vmatpush1.bf16.msra.mxu0 0
    %185 = vmatprep.subr.bf16.mxu0 0
    %186 = vmatpush1.bf16.msra.mxu0 0
    %187 = vmatprep.mubr.bf16.mxu0 0
    %188 = vmatmul.mubr.bf16.gmra.mrb[0].mxu0 %v99
    %v189 = vpop.f32.mrb[0].mxu0
    %v190 = vadd.f32 0.0, %v189
    %v191 = vpop.f32.mrb[0].mxu0
    %v192 = vadd.f32 0.0, %v191
    %v193 = vpop.f32.mrb[0].mxu0
    %v194 = vadd.f32 0.0, %v193
    %v195 = vpop.f32.mrb[0].mxu0
    %v196 = vadd.f32 0.0, %v195
    %197 = vmatprep.mubr.bf16.mxu0 0
    %198 = vmatmul.mubr.bf16.gmra.mrb[0].mxu0 %v102
    %v199 = vpop.f32.mrb[0].mxu0
    %v200 = vadd.f32 0.0, %v199
    %v201 = vpop.f32.mrb[0].mxu0
    %v202 = vadd.f32 0.0, %v201
    %v203 = vpop.f32.mrb[0].mxu0
    %v204 = vpop.f32.mrb[0].mxu0
    %205 = vdwg.mxu0
    %206 = vmatprep.subr.bf16.mxu0 %v84
    %207 = vmatpush1.bf16.msra.mxu0 %v83
    %208 = vmatprep.subr.bf16.mxu0 0
    %209 = vmatpush1.bf16.msra.mxu0 0
    %210 = vmatprep.subr.bf16.mxu0 0
    %211 = vmatpush1.bf16.msra.mxu0 0
    %212 = vmatprep.subr.bf16.mxu0 0
    %213 = vmatpush1.bf16.msra.mxu0 0
    %214 = vmatprep.subr.bf16.mxu0 0
    %215 = vmatpush1.bf16.msra.mxu0 0
    %216 = vmatprep.subr.bf16.mxu0 0
    %217 = vmatpush1.bf16.msra.mxu0 0
    %218 = vmatprep.subr.bf16.mxu0 0
    %219 = vmatpush1.bf16.msra.mxu0 0
    %220 = vmatprep.subr.bf16.mxu0 0
    %221 = vmatpush1.bf16.msra.mxu0 0
    %222 = vmatprep.subr.bf16.mxu0 0
    %223 = vmatpush1.bf16.msra.mxu0 0
    %224 = vmatprep.subr.bf16.mxu0 0
    %225 = vmatpush1.bf16.msra.mxu0 0
    %226 = vmatprep.subr.bf16.mxu0 0
    %227 = vmatpush1.bf16.msra.mxu0 0
    %228 = vmatprep.subr.bf16.mxu0 0
    %229 = vmatpush1.bf16.msra.mxu0 0
    %230 = vmatprep.subr.bf16.mxu0 0
    %231 = vmatpush1.bf16.msra.mxu0 0
    %232 = vmatprep.subr.bf16.mxu0 0
    %233 = vmatpush1.bf16.msra.mxu0 0
    %234 = vmatprep.subr.bf16.mxu0 0
    %235 = vmatpush1.bf16.msra.mxu0 0
    %236 = vmatprep.subr.bf16.mxu0 0
    %237 = vmatpush1.bf16.msra.mxu0 0
    %238 = vmatprep.mubr.bf16.mxu0 0
    %239 = vmatmul.mubr.bf16.gmra.mrb[0].mxu0 %v99
    %v240 = vpop.f32.mrb[0].mxu0
    %v241 = vadd.f32 0.0, %v240
    %v242 = vpop.f32.mrb[0].mxu0
    %v243 = vadd.f32 0.0, %v242
    %v244 = vpop.f32.mrb[0].mxu0
    %v245 = vadd.f32 0.0, %v244
    %v246 = vpop.f32.mrb[0].mxu0
    %v247 = vadd.f32 0.0, %v246
    %248 = vmatprep.mubr.bf16.mxu0 0
    %249 = vmatmul.mubr.bf16.gmra.mrb[0].mxu0 %v102
    %v250 = vpop.f32.mrb[0].mxu0
    %v251 = vadd.f32 0.0, %v250
    %v252 = vpop.f32.mrb[0].mxu0
    %v253 = vadd.f32 0.0, %v252
    %v254 = vpop.f32.mrb[0].mxu0
    %v255 = vpop.f32.mrb[0].mxu0
    %256 = vdwg.mxu0
    %257 = vmatprep.subr.bf16.mxu0 %v86
    %258 = vmatpush1.bf16.msra.mxu0 %v85
    %259 = vmatprep.subr.bf16.mxu0 0
    %260 = vmatpush1.bf16.msra.mxu0 0
    %261 = vmatprep.subr.bf16.mxu0 0
    %262 = vmatpush1.bf16.msra.mxu0 0
    %263 = vmatprep.subr.bf16.mxu0 0
    %264 = vmatpush1.bf16.msra.mxu0 0
    %265 = vmatprep.subr.bf16.mxu0 0
    %266 = vmatpush1.bf16.msra.mxu0 0
    %267 = vmatprep.subr.bf16.mxu0 0
    %268 = vmatpush1.bf16.msra.mxu0 0
    %269 = vmatprep.subr.bf16.mxu0 0
    %270 = vmatpush1.bf16.msra.mxu0 0
    %271 = vmatprep.subr.bf16.mxu0 0
    %272 = vmatpush1.bf16.msra.mxu0 0
    %273 = vmatprep.subr.bf16.mxu0 0
    %274 = vmatpush1.bf16.msra.mxu0 0
    %275 = vmatprep.subr.bf16.mxu0 0
    %276 = vmatpush1.bf16.msra.mxu0 0
    %277 = vmatprep.subr.bf16.mxu0 0
    %278 = vmatpush1.bf16.msra.mxu0 0
    %279 = vmatprep.subr.bf16.mxu0 0
    %280 = vmatpush1.bf16.msra.mxu0 0
    %281 = vmatprep.subr.bf16.mxu0 0
    %282 = vmatpush1.bf16.msra.mxu0 0
    %283 = vmatprep.subr.bf16.mxu0 0
    %284 = vmatpush1.bf16.msra.mxu0 0
    %285 = vmatprep.subr.bf16.mxu0 0
    %286 = vmatpush1.bf16.msra.mxu0 0
    %287 = vmatprep.subr.bf16.mxu0 0
    %288 = vmatpush1.bf16.msra.mxu0 0
    %289 = vmatprep.mubr.bf16.mxu0 0
    %290 = vmatmul.mubr.bf16.gmra.mrb[0].mxu0 %v99
    %v291 = vpop.f32.mrb[0].mxu0
    %v292 = vadd.f32 0.0, %v291
    %v293 = vpop.f32.mrb[0].mxu0
    %v294 = vadd.f32 0.0, %v293
    %v295 = vpop.f32.mrb[0].mxu0
    %v296 = vadd.f32 0.0, %v295
    %v297 = vpop.f32.mrb[0].mxu0
    %v298 = vadd.f32 0.0, %v297
    %299 = vmatprep.mubr.bf16.mxu0 0
    %300 = vmatmul.mubr.bf16.gmra.mrb[0].mxu0 %v102
    %v301 = vpop.f32.mrb[0].mxu0
    %v302 = vadd.f32 0.0, %v301
    %v303 = vpop.f32.mrb[0].mxu0
    %v304 = vadd.f32 0.0, %v303
    %v305 = vpop.f32.mrb[0].mxu0
    %v306 = vpop.f32.mrb[0].mxu0
    %307 = vdwg.mxu0
    %308 = vmatprep.subr.bf16.mxu0 0
    %309 = vmatpush1.bf16.msra.mxu0 %v87
    %310 = vmatprep.subr.bf16.mxu0 0
    %311 = vmatpush1.bf16.msra.mxu0 0
    %312 = vmatprep.subr.bf16.mxu0 0
    %313 = vmatpush1.bf16.msra.mxu0 0
    %314 = vmatprep.subr.bf16.mxu0 0
    %315 = vmatpush1.bf16.msra.mxu0 0
    %316 = vmatprep.subr.bf16.mxu0 0
    %317 = vmatpush1.bf16.msra.mxu0 0
    %318 = vmatprep.subr.bf16.mxu0 0
    %319 = vmatpush1.bf16.msra.mxu0 0
    %320 = vmatprep.subr.bf16.mxu0 0
    %321 = vmatpush1.bf16.msra.mxu0 0
    %322 = vmatprep.subr.bf16.mxu0 0
    %323 = vmatpush1.bf16.msra.mxu0 0
    %324 = vmatprep.subr.bf16.mxu0 0
    %325 = vmatpush1.bf16.msra.mxu0 0
    %326 = vmatprep.subr.bf16.mxu0 0
    %327 = vmatpush1.bf16.msra.mxu0 0
    %328 = vmatprep.subr.bf16.mxu0 0
    %329 = vmatpush1.bf16.msra.mxu0 0
    %330 = vmatprep.subr.bf16.mxu0 0
    %331 = vmatpush1.bf16.msra.mxu0 0
    %332 = vmatprep.subr.bf16.mxu0 0
    %333 = vmatpush1.bf16.msra.mxu0 0
    %334 = vmatprep.subr.bf16.mxu0 0
    %335 = vmatpush1.bf16.msra.mxu0 0
    %336 = vmatprep.subr.bf16.mxu0 0
    %337 = vmatpush1.bf16.msra.mxu0 0
    %338 = vmatprep.subr.bf16.mxu0 0
    %339 = vmatpush1.bf16.msra.mxu0 0
    %340 = vmatprep.mubr.bf16.mxu0 0
    %341 = vmatmul.mubr.bf16.gmra.mrb[0].mxu0 %v99
    %v342 = vpop.f32.mrb[0].mxu0
    %v343 = vadd.f32 0.0, %v342
    %v344 = vpop.f32.mrb[0].mxu0
    %v345 = vpop.f32.mrb[0].mxu0
    %v346 = vadd.f32 0.0, %v345
    %v347 = vpop.f32.mrb[0].mxu0
    %348 = vmatprep.mubr.bf16.mxu0 0
    %349 = vmatmul.mubr.bf16.gmra.mrb[0].mxu0 %v102
    %v350 = vpop.f32.mrb[0].mxu0
    %v351 = vadd.f32 0.0, %v350
    %v352 = vpop.f32.mrb[0].mxu0
    %v353 = vpop.f32.mrb[0].mxu0
    %v354 = vpop.f32.mrb[0].mxu0
    %355 = vdwg.mxu0
    %vm358 = vcmask 1046528
    %v359 = vrot.slane %v141, 1
    %v360 = vrot.slane %v145, 1
    %v361 = vsel %vm358, %v359, %v360
    %v364 = vadd.f32 %v139, %v361
    %v365 = vadd.f32 %v143, %v360
    %vm366 = vcmask 1042432
    %v367 = vsel %vm366, %v365, -inf
    %v368 = vmax.f32 %v364, %v367
    %v369 = vrot.slane %v368, 4
    %v370 = vmax.f32 %v368, %v369
    %v371 = vrot.slane %v370, 2
    %v372 = vmax.f32 %v370, %v371
    %v373 = vrot.slane %v372, 1
    %v374 = vmax.f32 %v372, %v373
    %v377 = vrot.slane %v192, 1
    %v378 = vrot.slane %v196, 1
    %v379 = vsel %vm358, %v377, %v378
    %v382 = vadd.f32 %v190, %v379
    %v383 = vadd.f32 %v194, %v378
    %vm386 = vcmask 1045504
    %v387 = vrot.slane %v241, 2
    %v388 = vrot.slane %v245, 2
    %v389 = vsel %vm386, %v387, %v388
    %v392 = vadd.f32 %v382, %v389
    %v393 = vadd.f32 %v383, %v388
    %vm394 = vcmask 1041408
    %v395 = vsel %vm394, %v393, -inf
    %v396 = vmax.f32 %v392, %v395
    %v397 = vrot.slane %v396, 4
    %v398 = vmax.f32 %v396, %v397
    %v399 = vrot.slane %v398, 2
    %v400 = vmax.f32 %v398, %v399
    %v401 = vrot.slane %v400, 1
    %v402 = vmax.f32 %v400, %v401
    %v405 = vrot.slane %v292, 1
    %v406 = vrot.slane %v296, 1
    %v407 = vsel %vm358, %v405, %v406
    %v410 = vadd.f32 %v243, %v407
    %v411 = vadd.f32 %v247, %v406
    %v414 = vrot.slane %v294, 2
    %v415 = vrot.slane %v298, 2
    %v416 = vsel %vm386, %v414, %v415
    %v419 = vadd.f32 %v410, %v416
    %v420 = vadd.f32 %v411, %v415
    %vm423 = vcmask 1044480
    %v424 = vrot.slane %v343, 3
    %v425 = vrot.slane %v346, 3
    %v426 = vsel %vm423, %v424, %v425
    %v429 = vadd.f32 %v419, %v426
    %v430 = vadd.f32 %v420, %v425
    %vm431 = vcmask 1040384
    %v432 = vsel %vm431, %v430, -inf
    %v433 = vmax.f32 %v429, %v432
    %v434 = vrot.slane %v433, 4
    %v435 = vmax.f32 %v433, %v434
    %v436 = vrot.slane %v435, 2
    %v437 = vmax.f32 %v435, %v436
    %v438 = vrot.slane %v437, 1
    %v439 = vmax.f32 %v437, %v438
    %v441 = vrot.slane %v151, 1
    %v442 = vsel %vm358, %v360, %v441
    %v445 = vadd.f32 %v143, %v442
    %v446 = vadd.f32 %v149, %v441
    %vm447 = vcmask 1047556
    %v448 = vsel %vm447, %v445, -inf
    %v449 = vsel %vm358, %v446, -inf
    %v450 = vmax.f32 %v448, %v449
    %v451 = vrot.slane %v450, 4
    %v452 = vmax.f32 %v450, %v451
    %v453 = vrot.slane %v452, 2
    %v454 = vmax.f32 %v452, %v453
    %v455 = vrot.slane %v454, 1
    %v456 = vmax.f32 %v454, %v455
    %v458 = vrot.slane %v202, 1
    %v459 = vsel %vm358, %v378, %v458
    %v462 = vadd.f32 %v194, %v459
    %v463 = vadd.f32 %v200, %v458
    %v465 = vrot.slane %v251, 2
    %v466 = vsel %vm386, %v388, %v465
    %v469 = vadd.f32 %v462, %v466
    %v470 = vadd.f32 %v463, %v465
    %v471 = vsel %vm447, %v469, -inf
    %v472 = vsel %vm386, %v470, -inf
    %v473 = vmax.f32 %v471, %v472
    %v474 = vrot.slane %v473, 4
    %v475 = vmax.f32 %v473, %v474
    %v476 = vrot.slane %v475, 2
    %v477 = vmax.f32 %v475, %v476
    %v478 = vrot.slane %v477, 1
    %v479 = vmax.f32 %v477, %v478
    %v481 = vrot.slane %v302, 1
    %v482 = vsel %vm358, %v406, %v481
    %v485 = vadd.f32 %v247, %v482
    %v486 = vadd.f32 %v253, %v481
    %v488 = vrot.slane %v304, 2
    %v489 = vsel %vm386, %v415, %v488
    %v492 = vadd.f32 %v485, %v489
    %v493 = vadd.f32 %v486, %v488
    %v495 = vrot.slane %v351, 3
    %v496 = vsel %vm423, %v425, %v495
    %v499 = vadd.f32 %v492, %v496
    %v500 = vadd.f32 %v493, %v495
    %v501 = vsel %vm447, %v499, -inf
    %v502 = vsel %vm423, %v500, -inf
    %v503 = vmax.f32 %v501, %v502
    %v504 = vrot.slane %v503, 4
    %v505 = vmax.f32 %v503, %v504
    %v506 = vrot.slane %v505, 2
    %v507 = vmax.f32 %v505, %v506
    %v508 = vrot.slane %v507, 1
    %v509 = vmax.f32 %v507, %v508
    %v513 = vrot.slane %v456, 7
    %v514 = vrot.slane %v479, 7
    %v515 = vrot.slane %v509, 7
    %v519 = vsel %vm431, %v374, %v513
    %v520 = vsel %vm431, %v402, %v514
    %v521 = vsel %vm431, %v439, %v515
    %v522 = vld [vmem:[%s2] sm:$0x7]
    %v524 = vlaneseq
    %v525 = vshrl.u32 %v524, 7
    %v526 = vsub.s32 0, %v525
    %v527 = vrot.slane %v522, %v526
    %v528 = vlaneseq
    %v529 = vshrl.u32 %v528, 7
    %v530 = vsub.s32 1, %v529
    %v531 = vrot.slane %v522, %v530
    %v532 = vlaneseq
    %v533 = vshrl.u32 %v532, 7
    %v534 = vsub.s32 2, %v533
    %v535 = vrot.slane %v522, %v534
    %v539 = vadd.f32 %v519, %v527
    %v540 = vadd.f32 %v520, %v531
    %v541 = vadd.f32 %v521, %v535
    %v542 = vmax.f32 %v539, 0.0
    %v543 = vmax.f32 %v540, 0.0
    %v544 = vmax.f32 %v541, 0.0
    %v548 = vcombine.low %v542, %v543
    %v550 = vunpack.c.l.s4 1983009808
    %v551 = vunpack.c.0.s8 %v550
    %v552 = vlaneseq
    %v553 = vshrl.u32 %v552, 7
    %v554 = vsub.s32 %v551, %v553
    %v555 = vrot.slane %v548, %v554
    %v557 = vunpack.c.l.s4 1983009808
    %v558 = vunpack.c.0.s8 %v557
    %v559 = vlaneseq
    %v560 = vshrl.u32 %v559, 7
    %v561 = vsub.s32 %v558, %v560
    %v562 = vrot.slane %v544, %v561
    %v563 = vcombine.low %v555, %v562
    %565 = vst [vmem:[#allocation5] sm:$0x3f] %v563
    // Predicated region
    $region18: #{tpu_custom_call.1} parent=1 // pred_check
      _
    $region19: #{tpu_custom_call.1} parent=1 // pred_check_branch
      %567 = sbr.rel (0) target = $region21
    $region20: #{tpu_custom_call.1} parent=1 // pred_region
      %s569 = ssub.s32 96, 96
      %570 = vsyncadd [#allocation4], %s569
      %s572 = sshll.u32 [#allocation5], 4
      %s573 = int_to_ptr.vmem [resolvable:$true] %s572
      %575 = dma.vmem_to_hbm [thread:$0]  %s573, 96, %s3, [#allocation4]
    $region21: #{tpu_custom_call.1} parent=1 // pred_fallthru
      _
    // Predicated region
    $region22: #{tpu_custom_call.1} parent=1 // pred_check
      _
    $region23: #{tpu_custom_call.1} parent=1 // pred_check_branch
      %577 = sbr.rel (0) target = $region25
    $region24: #{tpu_custom_call.1} parent=1 // pred_region
      %578 = dma.done [#allocation4], 96
    $region25: #{tpu_custom_call.1} parent=1 // pred_fallthru
      _
    %579 = vsyncpa [#allocation3], 1
    %580 = vsyncpa [#allocation4], 1

</llo_original>
